<compile_context>
chip_gen: v7x
topology: tpu7x:2x2x1
jax: 0.10.0
libtpu: 0.0.40
codegen_flags: <defaults>
</compile_context>

<pallas_src>
import math
import functools

import jax
import jax.numpy as jnp
from jax import lax
from jax.experimental import pallas as pl
from jax.experimental.pallas import tpu as pltpu


LANE = 128  # lane width; batch lives on this axis


def _round_up(x, m):
    return ((x + m - 1) // m) * m


def _gelu_exact(x):
    # Matches torch.nn.GELU() default (erf-based, not tanh approximation).
    return 0.5 * x * (1.0 + lax.erf(x * (1.0 / math.sqrt(2.0))))


def _layout(num_layers, input_dim, hidden_dim, action_dim):
    """Padded feature-major layout constants."""
    f_in = _round_up(input_dim, 8)          # input-feature rows of the x slab
    f_hid = _round_up(hidden_dim, 8)        # hidden-feature rows
    f_out = _round_up(2 * action_dim, 8)    # output rows (mu + log_std, fused heads)
    rmax = max(f_hid, f_out)                # rows of each packed param block (out features)
    cw = max(f_in, f_hid)                   # weight columns (in features)
    cmax = cw + 8                           # + bias / clamp-lo / clamp-hi columns
    num_blocks = num_layers + 1             # GELU layers + fused-head block
    return f_in, f_hid, f_out, rmax, cw, cmax, num_blocks


def _choose_batch_tiling(batch, max_block_batch):
    """Pick (bm, batch_pad); both multiples of 128 (batch is the lane axis).

    For >= 2 lane tiles we force an even block count >= 2 so the 'parallel'
    batch axis splits across both TensorCores on v7x (harmless on v5e/v6e).
    """
    max_block_batch = max(LANE, _round_up(max_block_batch, LANE))
    batch_pad = _round_up(max(batch, 1), LANE)
    n_tiles = batch_pad // LANE
    if n_tiles == 1:
        return LANE, LANE
    n_blocks = max(2, -(-batch_pad // max_block_batch))
    if n_blocks % 2:
        n_blocks += 1
    tiles_per_block = -(-n_tiles // n_blocks)
    bm = tiles_per_block * LANE
    batch_pad = _round_up(batch_pad, bm)
    return bm, batch_pad


def pack_params(params, *, num_layers, input_dim, hidden_dim, action_dim,
                log_std_min=-20.0, log_std_max=2.0):
    """Pack PyTorch-layout params into one (L, RMAX, CMAX) f32 buffer.

    Layer l block: rows = out features, cols [0:in_dim) = weight (out, in),
    col CW = bias, cols CW+1 / CW+2 = per-row clamp lo / hi (head block only;
    -inf/+inf identity bounds for mu / padded rows).  The last block holds the
    fused heads: mu rows [0:A), log_std rows [A:2A).  All other entries are
    zero, which keeps the math exact (GELU(0) == 0, zero weight columns).
    """
    f_in, f_hid, f_out, rmax, cw, cmax, L = _layout(
        num_layers, input_dim, hidden_dim, action_dim)
    A = action_dim
    buf = jnp.zeros((L, rmax, cmax), jnp.float32)

    buf = buf.at[0, :hidden_dim, :input_dim].set(params["w_in"])
    buf = buf.at[0, :hidden_dim, cw].set(params["b_in"])
    for i in range(num_layers - 1):
        buf = buf.at[1 + i, :hidden_dim, :hidden_dim].set(params["w_hid"][i])
        buf = buf.at[1 + i, :hidden_dim, cw].set(params["b_hid"][i])

    hd = L - 1
    buf = buf.at[hd, :A, :hidden_dim].set(params["w_mu"])
    buf = buf.at[hd, A:2 * A, :hidden_dim].set(params["w_ls"])
    buf = buf.at[hd, :A, cw].set(params["b_mu"])
    buf = buf.at[hd, A:2 * A, cw].set(params["b_ls"])
    # Per-row clamp bounds: identity (-inf, +inf) for mu / padded rows,
    # (log_std_min, log_std_max) for the log_std rows -> one max + one min in-kernel.
    lo = jnp.full((rmax,), -jnp.inf, jnp.float32).at[A:2 * A].set(float(log_std_min))
    hi = jnp.full((rmax,), jnp.inf, jnp.float32).at[A:2 * A].set(float(log_std_max))
    buf = buf.at[hd, :, cw + 1].set(lo)
    buf = buf.at[hd, :, cw + 2].set(hi)
    return buf


def _ppo_policy_kernel(num_blocks, f_in, f_hid, f_out, cw,
                       x_ref, p_ref, out_ref):
    """Feature-major forward pass for one batch block.

    x_ref:   (F_IN, BM)       padded states, batch on the lane axis.
    p_ref:   (L, RMAX, CMAX)  packed params (constant block -> DMA'd once).
    out_ref: (F_OUT, BM)      mu rows [0:A), clamped log_std rows [A:2A).
    """
    h = x_ref[...]
    c = f_in
    # input layer + hidden layers (all GELU'd); small static loop, fully unrolled
    for l in range(num_blocks - 1):
        w = p_ref[l, :f_hid, :c]                   # (F_HID, c) PyTorch (out, in)
        b = p_ref[l, :f_hid, cw:cw + 1]            # (F_HID, 1)
        h = _gelu_exact(jnp.dot(w, h, preferred_element_type=jnp.float32) + b)
        c = f_hid

    # fused heads: one matmul, mu rows [0:A), log_std rows [A:2A)
    hd = num_blocks - 1
    w = p_ref[hd, :f_out, :f_hid]
    b = p_ref[hd, :f_out, cw:cw + 1]
    lo = p_ref[hd, :f_out, cw + 1:cw + 2]          # -inf for mu rows
    hi = p_ref[hd, :f_out, cw + 2:cw + 3]          # +inf for mu rows
    y = jnp.dot(w, h, preferred_element_type=jnp.float32) + b
    out_ref[...] = jnp.minimum(jnp.maximum(y, lo), hi).astype(out_ref.dtype)


def ppo_policy_forward(x, packed_params, *, num_layers, input_dim, hidden_dim,
                       action_dim, max_block_batch=4096):
    """PPOPolicyNet forward. x: (batch, input_dim) f32. Returns (mu, log_std)."""
    batch = x.shape[0]
    f_in, f_hid, f_out, rmax, cw, cmax, L = _layout(
        num_layers, input_dim, hidden_dim, action_dim)
    assert packed_params.shape == (L, rmax, cmax), (packed_params.shape, (L, rmax, cmax))

    bm, batch_pad = _choose_batch_tiling(batch, max_block_batch)
    grid = (batch_pad // bm,)

    # Feature-major input slab (F_IN, batch_pad): ~16x smaller than a
    # (batch, 128) slab, so the wrapper-side relayout/pad is cheap.
    x_fm = jnp.zeros((f_in, batch_pad), jnp.float32)
    x_fm = x_fm.at[:input_dim, :batch].set(x.astype(jnp.float32).T)

    kernel = functools.partial(_ppo_policy_kernel, L, f_in, f_hid, f_out, cw)

    out = pl.pallas_call(
        kernel,
        out_shape=jax.ShapeDtypeStruct((f_out, batch_pad), jnp.float32),
        grid=grid,
        in_specs=[
            pl.BlockSpec((f_in, bm), lambda i: (0, i)),            # states (lane-dense)
            pl.BlockSpec((L, rmax, cmax), lambda i: (0, 0, 0)),    # packed params (constant block)
        ],
        out_specs=pl.BlockSpec((f_out, bm), lambda i: (0, i)),
        compiler_params=pltpu.CompilerParams(
            dimension_semantics=("parallel",),
        ),
    )(x_fm, packed_params)

    mu = out[:action_dim, :batch].T
    log_std = out[action_dim:2 * action_dim, :batch].T
    return mu, log_std


def init_params(key, num_layers, input_dim, hidden_dim, action_dim):
    """nn.Linear-style init: U(-1/sqrt(fan_in), 1/sqrt(fan_in)).

    Weights stored (out_features, in_features) like PyTorch; biases (out_features,).
    """
    def linear(key, fan_in, fan_out):
        bound = 1.0 / math.sqrt(fan_in)
        kw, kb = jax.random.split(key)
        w = jax.random.uniform(kw, (fan_out, fan_in), jnp.float32, -bound, bound)
        b = jax.random.uniform(kb, (fan_out,), jnp.float32, -bound, bound)
        return w, b

    keys = jax.random.split(key, num_layers + 2)
    w_in, b_in = linear(keys[0], input_dim, hidden_dim)
    w_hid, b_hid = [], []
    for i in range(num_layers - 1):
        w, b = linear(keys[1 + i], hidden_dim, hidden_dim)
        w_hid.append(w)
        b_hid.append(b)
    w_mu, b_mu = linear(keys[num_layers], hidden_dim, action_dim)
    w_ls, b_ls = linear(keys[num_layers + 1], hidden_dim, action_dim)
    return {
        "w_in": w_in, "b_in": b_in,
        "w_hid": w_hid, "b_hid": b_hid,
        "w_mu": w_mu, "b_mu": b_mu,
        "w_ls": w_ls, "b_ls": b_ls,
    }


def reference_forward(x, params, *, num_layers, log_std_min=-20.0, log_std_max=2.0):
    # Pure-JAX reference (PyTorch semantics) for correctness checking.
    h = _gelu_exact(x @ params["w_in"].T + params["b_in"])
    for i in range(num_layers - 1):
        h = _gelu_exact(h @ params["w_hid"][i].T + params["b_hid"][i])
    mu = h @ params["w_mu"].T + params["b_mu"]
    log_std = jnp.clip(h @ params["w_ls"].T + params["b_ls"], log_std_min, log_std_max)
    return mu, log_std


if __name__ == "__main__":
    # Pendulum-v1: state dim = 3, action dim = 1.
    num_layers = 2
    input_dim = 3
    hidden_dim = 32
    action_dim = 1
    batch = 8

    key = jax.random.PRNGKey(0)
    k_x, k_p, k_x2 = jax.random.split(key, 3)
    params = init_params(k_p, num_layers, input_dim, hidden_dim, action_dim)
    packed = pack_params(params, num_layers=num_layers, input_dim=input_dim,
                         hidden_dim=hidden_dim, action_dim=action_dim,
                         log_std_min=-20.0, log_std_max=2.0)

    # small demo batch (single 128-lane block, grid = 1)
    x = jax.random.normal(k_x, (batch, input_dim), jnp.float32)
    mu, log_std = ppo_policy_forward(
        x, packed, num_layers=num_layers, input_dim=input_dim,
        hidden_dim=hidden_dim, action_dim=action_dim)
    mu = jax.block_until_ready(mu)
    log_std = jax.block_until_ready(log_std)

    mu_ref, ls_ref = reference_forward(x, params, num_layers=num_layers)
    assert mu.shape == (batch, action_dim)
    assert log_std.shape == (batch, action_dim)
    assert jnp.allclose(mu, mu_ref, atol=1e-5, rtol=1e-5)
    assert jnp.allclose(log_std, ls_ref, atol=1e-5, rtol=1e-5)

    # second check exercising the multi-block, even-grid batch-tiling path
    batch2 = 300   # -> bm=256, batch_pad=512, grid=(2,)
    x2 = jax.random.normal(k_x2, (batch2, input_dim), jnp.float32) * 3.0
    mu2, ls2 = ppo_policy_forward(
        x2, packed, num_layers=num_layers, input_dim=input_dim,
        hidden_dim=hidden_dim, action_dim=action_dim)
    mu2 = jax.block_until_ready(mu2)
    ls2 = jax.block_until_ready(ls2)
    mu2_ref, ls2_ref = reference_forward(x2, params, num_layers=num_layers)
    assert jnp.allclose(mu2, mu2_ref, atol=1e-5, rtol=1e-5)
    assert jnp.allclose(ls2, ls2_ref, atol=1e-5, rtol=1e-5)

    print("KERNEL_OK")
</pallas_src>

<mosaic_0001>
module attributes {stable_mosaic.version = 11 : i64} {
  func.func @_ppo_policy_kernel(%arg0: i32, %arg1: memref<8x128xf32, #tpu.memory_space<vmem>>, %arg2: memref<3x32x40xf32, #tpu.memory_space<vmem>>, %arg3: memref<8x128xf32, #tpu.memory_space<vmem>>) attributes {dimension_semantics = [#tpu.dimension_semantics<parallel>], iteration_bounds = array<i64: 1>, scalar_prefetch = 0 : i64, scratch_operands = 0 : i64, tpu.core_type = #tpu.core_type<tc>, window_params = [{transform_indices = @transform_0, window_bounds = array<i64: 8, 128>}, {pipeline_mode = #tpu.pipeline_mode<synchronous>, transform_indices = @transform_1, window_bounds = array<i64: 3, 32, 40>}, {transform_indices = @transform_2, window_bounds = array<i64: 8, 128>}]} {
    %c0 = arith.constant 0 : index
    %c0_0 = arith.constant 0 : index
    %0 = vector.load %arg1[%c0, %c0_0] : memref<8x128xf32, #tpu.memory_space<vmem>>, vector<8x128xf32>
    %c0_1 = arith.constant 0 : index
    %c0_2 = arith.constant 0 : index
    %c0_3 = arith.constant 0 : index
    %1 = vector.load %arg2[%c0_1, %c0_2, %c0_3] : memref<3x32x40xf32, #tpu.memory_space<vmem>>, vector<1x32x8xf32>
    %2 = vector.shape_cast %1 : vector<1x32x8xf32> to vector<32x8xf32>
    %c0_4 = arith.constant 0 : index
    %c0_5 = arith.constant 0 : index
    %c32 = arith.constant 32 : index
    %3 = vector.load %arg2[%c0_4, %c0_5, %c32] : memref<3x32x40xf32, #tpu.memory_space<vmem>>, vector<1x32x1xf32>
    %4 = vector.shape_cast %3 : vector<1x32x1xf32> to vector<32x1xf32>
    %cst = arith.constant dense<0.000000e+00> : vector<32x128xf32>
    %5 = tpu.matmul %2, %0, %cst {dimension_numbers = #tpu.dot_dimension_numbers<[1], [0], [0], [1], [0, 0, 1, 1], [], []>} : vector<32x8xf32>, vector<8x128xf32>, vector<32x128xf32> -> vector<32x128xf32>
    %6 = vector.broadcast %4 : vector<32x1xf32> to vector<32x128xf32>
    %7 = arith.addf %5, %6 : vector<32x128xf32>
    %cst_6 = arith.constant 5.000000e-01 : f32
    %8 = vector.broadcast %cst_6 : f32 to vector<32x128xf32>
    %9 = arith.mulf %8, %7 : vector<32x128xf32>
    %cst_7 = arith.constant 0.707106769 : f32
    %10 = vector.broadcast %cst_7 : f32 to vector<32x128xf32>
    %11 = arith.mulf %7, %10 : vector<32x128xf32>
    %12 = math.erf %11 : vector<32x128xf32>
    %cst_8 = arith.constant 1.000000e+00 : f32
    %13 = vector.broadcast %cst_8 : f32 to vector<32x128xf32>
    %14 = arith.addf %13, %12 : vector<32x128xf32>
    %15 = arith.mulf %9, %14 : vector<32x128xf32>
    %c1 = arith.constant 1 : index
    %c0_9 = arith.constant 0 : index
    %c0_10 = arith.constant 0 : index
    %16 = vector.load %arg2[%c1, %c0_9, %c0_10] : memref<3x32x40xf32, #tpu.memory_space<vmem>>, vector<1x32x32xf32>
    %17 = vector.shape_cast %16 : vector<1x32x32xf32> to vector<32x32xf32>
    %c1_11 = arith.constant 1 : index
    %c0_12 = arith.constant 0 : index
    %c32_13 = arith.constant 32 : index
    %18 = vector.load %arg2[%c1_11, %c0_12, %c32_13] : memref<3x32x40xf32, #tpu.memory_space<vmem>>, vector<1x32x1xf32>
    %19 = vector.shape_cast %18 : vector<1x32x1xf32> to vector<32x1xf32>
    %cst_14 = arith.constant dense<0.000000e+00> : vector<32x128xf32>
    %20 = tpu.matmul %17, %15, %cst_14 {dimension_numbers = #tpu.dot_dimension_numbers<[1], [0], [0], [1], [0, 0, 1, 1], [], []>} : vector<32x32xf32>, vector<32x128xf32>, vector<32x128xf32> -> vector<32x128xf32>
    %21 = vector.broadcast %19 : vector<32x1xf32> to vector<32x128xf32>
    %22 = arith.addf %20, %21 : vector<32x128xf32>
    %cst_15 = arith.constant 5.000000e-01 : f32
    %23 = vector.broadcast %cst_15 : f32 to vector<32x128xf32>
    %24 = arith.mulf %23, %22 : vector<32x128xf32>
    %cst_16 = arith.constant 0.707106769 : f32
    %25 = vector.broadcast %cst_16 : f32 to vector<32x128xf32>
    %26 = arith.mulf %22, %25 : vector<32x128xf32>
    %27 = math.erf %26 : vector<32x128xf32>
    %cst_17 = arith.constant 1.000000e+00 : f32
    %28 = vector.broadcast %cst_17 : f32 to vector<32x128xf32>
    %29 = arith.addf %28, %27 : vector<32x128xf32>
    %30 = arith.mulf %24, %29 : vector<32x128xf32>
    %c2 = arith.constant 2 : index
    %c0_18 = arith.constant 0 : index
    %c0_19 = arith.constant 0 : index
    %31 = vector.load %arg2[%c2, %c0_18, %c0_19] : memref<3x32x40xf32, #tpu.memory_space<vmem>>, vector<1x8x32xf32>
    %32 = vector.shape_cast %31 : vector<1x8x32xf32> to vector<8x32xf32>
    %c2_20 = arith.constant 2 : index
    %c0_21 = arith.constant 0 : index
    %c32_22 = arith.constant 32 : index
    %33 = vector.load %arg2[%c2_20, %c0_21, %c32_22] : memref<3x32x40xf32, #tpu.memory_space<vmem>>, vector<1x8x1xf32>
    %34 = vector.shape_cast %33 : vector<1x8x1xf32> to vector<8x1xf32>
    %c2_23 = arith.constant 2 : index
    %c0_24 = arith.constant 0 : index
    %c33 = arith.constant 33 : index
    %35 = vector.load %arg2[%c2_23, %c0_24, %c33] : memref<3x32x40xf32, #tpu.memory_space<vmem>>, vector<1x8x1xf32>
    %36 = vector.shape_cast %35 : vector<1x8x1xf32> to vector<8x1xf32>
    %c2_25 = arith.constant 2 : index
    %c0_26 = arith.constant 0 : index
    %c34 = arith.constant 34 : index
    %37 = vector.load %arg2[%c2_25, %c0_26, %c34] : memref<3x32x40xf32, #tpu.memory_space<vmem>>, vector<1x8x1xf32>
    %38 = vector.shape_cast %37 : vector<1x8x1xf32> to vector<8x1xf32>
    %cst_27 = arith.constant dense<0.000000e+00> : vector<8x128xf32>
    %39 = tpu.matmul %32, %30, %cst_27 {dimension_numbers = #tpu.dot_dimension_numbers<[1], [0], [0], [1], [0, 0, 1, 1], [], []>} : vector<8x32xf32>, vector<32x128xf32>, vector<8x128xf32> -> vector<8x128xf32>
    %40 = vector.broadcast %34 : vector<8x1xf32> to vector<8x128xf32>
    %41 = arith.addf %39, %40 : vector<8x128xf32>
    %42 = vector.broadcast %36 : vector<8x1xf32> to vector<8x128xf32>
    %43 = arith.maximumf %41, %42 : vector<8x128xf32>
    %44 = vector.broadcast %38 : vector<8x1xf32> to vector<8x128xf32>
    %45 = arith.minimumf %43, %44 : vector<8x128xf32>
    %c0_28 = arith.constant 0 : index
    %c0_29 = arith.constant 0 : index
    %46 = vector.load %arg3[%c0_28, %c0_29] : memref<8x128xf32, #tpu.memory_space<vmem>>, vector<8x128xf32>
    tpu.vector_store %arg3[%c0_28, %c0_29], %45 {strides = array<i32>} : memref<8x128xf32, #tpu.memory_space<vmem>>, vector<8x128xf32>,
    return
  }
  func.func @transform_0(%arg0: i32) -> (i32, i32) {
    %c0_i32 = arith.constant 0 : i32
    %c0_i32_0 = arith.constant 0 : i32
    return %c0_i32, %arg0 : i32, i32
  }
  func.func @transform_1(%arg0: i32) -> (i32, i32, i32) {
    %c0_i32 = arith.constant 0 : i32
    %c0_i32_0 = arith.constant 0 : i32
    %c0_i32_1 = arith.constant 0 : i32
    %c0_i32_2 = arith.constant 0 : i32
    return %c0_i32, %c0_i32_0, %c0_i32_1 : i32, i32, i32
  }
  func.func @transform_2(%arg0: i32) -> (i32, i32) {
    %c0_i32 = arith.constant 0 : i32
    %c0_i32_0 = arith.constant 0 : i32
    return %c0_i32, %arg0 : i32, i32
  }
}

</mosaic_0001>

<llo_original>
// kernel: tpu_custom_call.1
$region0: #{tpu_custom_call.1}
  #allocation0 [shape = 'u32[]', space=smem, size = 0x4, offset = 0x4, fixed_abs, tag = 'smem constant byte address 0x4 - core index']
  #allocation1 [shape = 'u32[144,128]{1,0:T(1,128)}', space=vmem, size = 0x12000, scoped, tag = 'internal scratch']
  %s0 = inlined_call_operand.hbm [shape: f32[8,128], index: 0, kind: input, shape index: {}]
  %s1 = inlined_call_operand.hbm [shape: f32[3,32,40], index: 1, kind: input, shape index: {}]
  %s2 = inlined_call_operand.hbm [shape: f32[8,128], index: 2, kind: output, shape index: {}]
  %s3 = sld [smem:[#allocation0]]
  $region26: #{tpu_custom_call.1} parent=0
    _
  %s5 = ssub.s32 1, %s3
  %s6 = scalar_select 0, %s5, %s3
  $region1: #{tpu_custom_call.1} parent=0
    #allocation2 [shape = 'u8[4096]{0}', space=vmem, size = 0x1000, scoped, tag = 'input window, operand 0, single buffered']
    #allocation3 [shape = 's32[1]{0}', space=sflag, size = 0x4, scoped, tag = 'scoped memory for tpu_custom_call.1']
    #allocation4 [shape = 's32[1]{0}', space=sflag, size = 0x4, scoped, tag = 'scoped memory for tpu_custom_call.1']
    #allocation5 [shape = 'u8[49152]{0}', space=vmem, size = 0xc000, scoped, tag = 'input window, operand 1, single buffered']
    #allocation6 [shape = 's32[1]{0}', space=sflag, size = 0x4, scoped, tag = 'scoped memory for tpu_custom_call.1']
    #allocation7 [shape = 'u8[4096]{0}', space=vmem, size = 0x1000, scoped, tag = 'output window, operand 0, single buffered']
    %7 = vsyncpa [#allocation3], 0
    %8 = vsyncpa [#allocation6], 0
    %9 = vsyncpa [#allocation4], 0
    // Predicated region
    $region2: #{tpu_custom_call.1} parent=1 // pred_check
      _
    $region3: #{tpu_custom_call.1} parent=1 // pred_check_branch
      %11 = sbr.rel (0) target = $region5
    $region4: #{tpu_custom_call.1} parent=1 // pred_region
      %s13 = ssub.s32 128, 128
      %14 = vsyncadd [#allocation3], %s13
      %s16 = sshll.u32 [#allocation2], 4
      %s17 = int_to_ptr.vmem [resolvable:$true] %s16
      %19 = dma.hbm_to_vmem [thread:$0]  %s0, 128, %s17, [#allocation3]
    $region5: #{tpu_custom_call.1} parent=1 // pred_fallthru
      _
    // Predicated region
    $region6: #{tpu_custom_call.1} parent=1 // pred_check
      _
    $region7: #{tpu_custom_call.1} parent=1 // pred_check_branch
      %21 = sbr.rel (0) target = $region9
    $region8: #{tpu_custom_call.1} parent=1 // pred_region
      %s23 = ssub.s32 1536, 1536
      %24 = vsyncadd [#allocation6], %s23
      %s25 = sshll.u32 [#allocation5], 4
      %s26 = int_to_ptr.vmem [resolvable:$true] %s25
      %31 = dma.hbm_to_vmem [thread:$0]  %s1, 1536, %s26, [#allocation6], 128, 128, 8
    $region9: #{tpu_custom_call.1} parent=1 // pred_fallthru
      _
    // Predicated region
    $region10: #{tpu_custom_call.1} parent=1 // pred_check
      _
    $region11: #{tpu_custom_call.1} parent=1 // pred_check_branch
      %33 = sbr.rel (0) target = $region13
    $region12: #{tpu_custom_call.1} parent=1 // pred_region
      %34 = dma.done [#allocation3], 128
    $region13: #{tpu_custom_call.1} parent=1 // pred_fallthru
      _
    // Predicated region
    $region14: #{tpu_custom_call.1} parent=1 // pred_check
      _
    $region15: #{tpu_custom_call.1} parent=1 // pred_check_branch
      %36 = sbr.rel (0) target = $region17
    $region16: #{tpu_custom_call.1} parent=1 // pred_region
      %37 = dma.done [#allocation6], 1536
    $region17: #{tpu_custom_call.1} parent=1 // pred_fallthru
      _
    %v38 = vld [vmem:[#allocation2] sm:$0xff]
    %v39 = vld [vmem:[#allocation5] sm:$0xff]
    %v40 = vld [vmem:[#allocation5 + $0x8] sm:$0xff]
    %v41 = vld [vmem:[#allocation5 + $0x10] sm:$0xff]
    %v42 = vld [vmem:[#allocation5 + $0x18] sm:$0xff]
    %44 = vset.pattern.permute.xlu0 32
    %45 = vperm.xlu0 %44, %v39
    %v46 = vpop.permute.xlu0 %45
    %49 = vset.pattern.permute.xlu0 32
    %50 = vperm.xlu0 %49, %v40
    %v51 = vpop.permute.xlu0 %50
    %54 = vset.pattern.permute.xlu0 32
    %55 = vperm.xlu0 %54, %v41
    %v56 = vpop.permute.xlu0 %55
    %59 = vset.pattern.permute.xlu0 32
    %60 = vperm.xlu0 %59, %v42
    %v61 = vpop.permute.xlu0 %60
    %vm63 = vcmask 64512
    %v64 = vsel %vm63, %v39, 0
    %v66 = vsel %vm63, %v40, 0
    %v68 = vsel %vm63, %v41, 0
    %v70 = vsel %vm63, %v42, 0
    %72 = vmatprep.subr.mxu0 0.0
    %73 = vmatpush1.msra.mxu0 %v38
    %74 = vmatprep.subr.mxu0 0.0
    %75 = vmatpush1.msra.mxu0 0.0
    %76 = vmatprep.subr.mxu0 0.0
    %77 = vmatpush1.msra.mxu0 0.0
    %78 = vmatprep.subr.mxu0 0.0
    %79 = vmatpush1.msra.mxu0 0.0
    %80 = vmatprep.subr.mxu0 0.0
    %81 = vmatpush1.msra.mxu0 0.0
    %82 = vmatprep.subr.mxu0 0.0
    %83 = vmatpush1.msra.mxu0 0.0
    %84 = vmatprep.subr.mxu0 0.0
    %85 = vmatpush1.msra.mxu0 0.0
    %86 = vmatprep.subr.mxu0 0.0
    %87 = vmatpush1.msra.mxu0 0.0
    %88 = vmatprep.subr.mxu0 0.0
    %89 = vmatpush1.msra.mxu0 0.0
    %90 = vmatprep.subr.mxu0 0.0
    %91 = vmatpush1.msra.mxu0 0.0
    %92 = vmatprep.subr.mxu0 0.0
    %93 = vmatpush1.msra.mxu0 0.0
    %94 = vmatprep.subr.mxu0 0.0
    %95 = vmatpush1.msra.mxu0 0.0
    %96 = vmatprep.subr.mxu0 0.0
    %97 = vmatpush1.msra.mxu0 0.0
    %98 = vmatprep.subr.mxu0 0.0
    %99 = vmatpush1.msra.mxu0 0.0
    %100 = vmatprep.subr.mxu0 0.0
    %101 = vmatpush1.msra.mxu0 0.0
    %102 = vmatprep.subr.mxu0 0.0
    %103 = vmatpush1.msra.mxu0 0.0
    %104 = vmatprep.subr.mxu0 0.0
    %105 = vmatpush1.msra.mxu0 0.0
    %106 = vmatprep.subr.mxu0 0.0
    %107 = vmatpush1.msra.mxu0 0.0
    %108 = vmatprep.subr.mxu0 0.0
    %109 = vmatpush1.msra.mxu0 0.0
    %110 = vmatprep.subr.mxu0 0.0
    %111 = vmatpush1.msra.mxu0 0.0
    %112 = vmatprep.subr.mxu0 0.0
    %113 = vmatpush1.msra.mxu0 0.0
    %114 = vmatprep.subr.mxu0 0.0
    %115 = vmatpush1.msra.mxu0 0.0
    %116 = vmatprep.subr.mxu0 0.0
    %117 = vmatpush1.msra.mxu0 0.0
    %118 = vmatprep.subr.mxu0 0.0
    %119 = vmatpush1.msra.mxu0 0.0
    %120 = vmatprep.subr.mxu0 0.0
    %121 = vmatpush1.msra.mxu0 0.0
    %122 = vmatprep.subr.mxu0 0.0
    %123 = vmatpush1.msra.mxu0 0.0
    %124 = vmatprep.subr.mxu0 0.0
    %125 = vmatpush1.msra.mxu0 0.0
    %126 = vmatprep.subr.mxu0 0.0
    %127 = vmatpush1.msra.mxu0 0.0
    %128 = vmatprep.subr.mxu0 0.0
    %129 = vmatpush1.msra.mxu0 0.0
    %130 = vmatprep.subr.mxu0 0.0
    %131 = vmatpush1.msra.mxu0 0.0
    %132 = vmatprep.subr.mxu0 0.0
    %133 = vmatpush1.msra.mxu0 0.0
    %134 = vmatprep.subr.mxu0 0.0
    %135 = vmatpush1.msra.mxu0 0.0
    %136 = vmatprep.mubr.f32.mxu0 0.0
    %137 = vmatmul.mubr.f32.gmra.mrb[0].mxu0 %v64
    %v138 = vpop.f32.mrb[0].mxu0
    %v139 = vadd.f32 %v46, %v138
    %v140 = vpop.f32.mrb[0].mxu0
    %141 = vmatprep.mubr.f32.mxu0 0.0
    %142 = vmatmul.mubr.f32.gmra.mrb[0].mxu0 %v66
    %v143 = vpop.f32.mrb[0].mxu0
    %v144 = vadd.f32 %v51, %v143
    %v145 = vpop.f32.mrb[0].mxu0
    %146 = vmatprep.mubr.f32.mxu0 0.0
    %147 = vmatmul.mubr.f32.gmra.mrb[0].mxu0 %v68
    %v148 = vpop.f32.mrb[0].mxu0
    %v149 = vadd.f32 %v56, %v148
    %v150 = vpop.f32.mrb[0].mxu0
    %151 = vmatprep.mubr.f32.mxu0 0.0
    %152 = vmatmul.mubr.f32.gmra.mrb[0].mxu0 %v70
    %v153 = vpop.f32.mrb[0].mxu0
    %v154 = vadd.f32 %v61, %v153
    %v155 = vpop.f32.mrb[0].mxu0
    %156 = vdwg.mxu0
    %v157 = vmul.f32 %v139, 0.5
    %v158 = vmul.f32 %v144, 0.5
    %v159 = vmul.f32 %v149, 0.5
    %v160 = vmul.f32 %v154, 0.5
    %v161 = vmul.f32 %v139, 0.70710677
    %v162 = vmul.f32 %v144, 0.70710677
    %v163 = vmul.f32 %v149, 0.70710677
    %v164 = vmul.f32 %v154, 0.70710677
    %v165 = verf.f32.pop %v161
    %v166 = verf.f32.pop %v162
    %v167 = verf.f32.pop %v163
    %v168 = verf.f32.pop %v164
    %v169 = vadd.f32 %v165, 1.0
    %v170 = vadd.f32 %v166, 1.0
    %v171 = vadd.f32 %v167, 1.0
    %v172 = vadd.f32 %v168, 1.0
    %v173 = vmul.f32 %v157, %v169
    %v174 = vmul.f32 %v158, %v170
    %v175 = vmul.f32 %v159, %v171
    %v176 = vmul.f32 %v160, %v172
    %s177 = scalar_lea.vmem [#allocation5], 32
    %v178 = vld [vmem:[%s177] sm:$0xff]
    %v179 = vld [vmem:[%s177 + $0x8] sm:$0xff]
    %v180 = vld [vmem:[%s177 + $0x10] sm:$0xff]
    %v181 = vld [vmem:[%s177 + $0x18] sm:$0xff]
    %183 = vset.pattern.permute.xlu0 32
    %184 = vperm.xlu0 %183, %v178
    %v185 = vpop.permute.xlu0 %184
    %188 = vset.pattern.permute.xlu0 32
    %189 = vperm.xlu0 %188, %v179
    %v190 = vpop.permute.xlu0 %189
    %193 = vset.pattern.permute.xlu0 32
    %194 = vperm.xlu0 %193, %v180
    %v195 = vpop.permute.xlu0 %194
    %198 = vset.pattern.permute.xlu0 32
    %199 = vperm.xlu0 %198, %v181
    %v200 = vpop.permute.xlu0 %199
    %vm202 = vcmask 261120
    %v203 = vsel %vm202, %v178, 0
    %v205 = vsel %vm202, %v179, 0
    %v207 = vsel %vm202, %v180, 0
    %v209 = vsel %vm202, %v181, 0
    %211 = vmatprep.subr.mxu0 0.0
    %212 = vmatpush1.msra.mxu0 %v173
    %213 = vmatprep.subr.mxu0 0.0
    %214 = vmatpush1.msra.mxu0 %v174
    %215 = vmatprep.subr.mxu0 0.0
    %216 = vmatpush1.msra.mxu0 %v175
    %217 = vmatprep.subr.mxu0 0.0
    %218 = vmatpush1.msra.mxu0 %v176
    %219 = vmatprep.subr.mxu0 0.0
    %220 = vmatpush1.msra.mxu0 0.0
    %221 = vmatprep.subr.mxu0 0.0
    %222 = vmatpush1.msra.mxu0 0.0
    %223 = vmatprep.subr.mxu0 0.0
    %224 = vmatpush1.msra.mxu0 0.0
    %225 = vmatprep.subr.mxu0 0.0
    %226 = vmatpush1.msra.mxu0 0.0
    %227 = vmatprep.subr.mxu0 0.0
    %228 = vmatpush1.msra.mxu0 0.0
    %229 = vmatprep.subr.mxu0 0.0
    %230 = vmatpush1.msra.mxu0 0.0
    %231 = vmatprep.subr.mxu0 0.0
    %232 = vmatpush1.msra.mxu0 0.0
    %233 = vmatprep.subr.mxu0 0.0
    %234 = vmatpush1.msra.mxu0 0.0
    %235 = vmatprep.subr.mxu0 0.0
    %236 = vmatpush1.msra.mxu0 0.0
    %237 = vmatprep.subr.mxu0 0.0
    %238 = vmatpush1.msra.mxu0 0.0
    %239 = vmatprep.subr.mxu0 0.0
    %240 = vmatpush1.msra.mxu0 0.0
    %241 = vmatprep.subr.mxu0 0.0
    %242 = vmatpush1.msra.mxu0 0.0
    %243 = vmatprep.subr.mxu0 0.0
    %244 = vmatpush1.msra.mxu0 0.0
    %245 = vmatprep.subr.mxu0 0.0
    %246 = vmatpush1.msra.mxu0 0.0
    %247 = vmatprep.subr.mxu0 0.0
    %248 = vmatpush1.msra.mxu0 0.0
    %249 = vmatprep.subr.mxu0 0.0
    %250 = vmatpush1.msra.mxu0 0.0
    %251 = vmatprep.subr.mxu0 0.0
    %252 = vmatpush1.msra.mxu0 0.0
    %253 = vmatprep.subr.mxu0 0.0
    %254 = vmatpush1.msra.mxu0 0.0
    %255 = vmatprep.subr.mxu0 0.0
    %256 = vmatpush1.msra.mxu0 0.0
    %257 = vmatprep.subr.mxu0 0.0
    %258 = vmatpush1.msra.mxu0 0.0
    %259 = vmatprep.subr.mxu0 0.0
    %260 = vmatpush1.msra.mxu0 0.0
    %261 = vmatprep.subr.mxu0 0.0
    %262 = vmatpush1.msra.mxu0 0.0
    %263 = vmatprep.subr.mxu0 0.0
    %264 = vmatpush1.msra.mxu0 0.0
    %265 = vmatprep.subr.mxu0 0.0
    %266 = vmatpush1.msra.mxu0 0.0
    %267 = vmatprep.subr.mxu0 0.0
    %268 = vmatpush1.msra.mxu0 0.0
    %269 = vmatprep.subr.mxu0 0.0
    %270 = vmatpush1.msra.mxu0 0.0
    %271 = vmatprep.subr.mxu0 0.0
    %272 = vmatpush1.msra.mxu0 0.0
    %273 = vmatprep.subr.mxu0 0.0
    %274 = vmatpush1.msra.mxu0 0.0
    %275 = vmatprep.mubr.f32.mxu0 0.0
    %276 = vmatmul.mubr.f32.gmra.mrb[0].mxu0 %v203
    %v277 = vpop.f32.mrb[0].mxu0
    %v278 = vadd.f32 %v185, %v277
    %v279 = vpop.f32.mrb[0].mxu0
    %280 = vmatprep.mubr.f32.mxu0 0.0
    %281 = vmatmul.mubr.f32.gmra.mrb[0].mxu0 %v205
    %v282 = vpop.f32.mrb[0].mxu0
    %v283 = vadd.f32 %v190, %v282
    %v284 = vpop.f32.mrb[0].mxu0
    %285 = vmatprep.mubr.f32.mxu0 0.0
    %286 = vmatmul.mubr.f32.gmra.mrb[0].mxu0 %v207
    %v287 = vpop.f32.mrb[0].mxu0
    %v288 = vadd.f32 %v195, %v287
    %v289 = vpop.f32.mrb[0].mxu0
    %290 = vmatprep.mubr.f32.mxu0 0.0
    %291 = vmatmul.mubr.f32.gmra.mrb[0].mxu0 %v209
    %v292 = vpop.f32.mrb[0].mxu0
    %v293 = vadd.f32 %v200, %v292
    %v294 = vpop.f32.mrb[0].mxu0
    %295 = vdwg.mxu0
    %v296 = vmul.f32 %v278, 0.5
    %v297 = vmul.f32 %v283, 0.5
    %v298 = vmul.f32 %v288, 0.5
    %v299 = vmul.f32 %v293, 0.5
    %v300 = vmul.f32 %v278, 0.70710677
    %v301 = vmul.f32 %v283, 0.70710677
    %v302 = vmul.f32 %v288, 0.70710677
    %v303 = vmul.f32 %v293, 0.70710677
    %v304 = verf.f32.pop %v300
    %v305 = verf.f32.pop %v301
    %v306 = verf.f32.pop %v302
    %v307 = verf.f32.pop %v303
    %v308 = vadd.f32 %v304, 1.0
    %v309 = vadd.f32 %v305, 1.0
    %v310 = vadd.f32 %v306, 1.0
    %v311 = vadd.f32 %v307, 1.0
    %v312 = vmul.f32 %v296, %v308
    %v313 = vmul.f32 %v297, %v309
    %v314 = vmul.f32 %v298, %v310
    %v315 = vmul.f32 %v299, %v311
    %s316 = scalar_lea.vmem [#allocation5], 64
    %v317 = vld [vmem:[%s316] sm:$0xff]
    %319 = vset.pattern.permute.xlu0 32
    %320 = vperm.xlu0 %319, %v317
    %v321 = vpop.permute.xlu0 %320
    %v323 = vsel %vm202, %v317, 0
    %325 = vmatprep.subr.mxu0 0.0
    %326 = vmatpush1.msra.mxu0 %v312
    %327 = vmatprep.subr.mxu0 0.0
    %328 = vmatpush1.msra.mxu0 %v313
    %329 = vmatprep.subr.mxu0 0.0
    %330 = vmatpush1.msra.mxu0 %v314
    %331 = vmatprep.subr.mxu0 0.0
    %332 = vmatpush1.msra.mxu0 %v315
    %333 = vmatprep.subr.mxu0 0.0
    %334 = vmatpush1.msra.mxu0 0.0
    %335 = vmatprep.subr.mxu0 0.0
    %336 = vmatpush1.msra.mxu0 0.0
    %337 = vmatprep.subr.mxu0 0.0
    %338 = vmatpush1.msra.mxu0 0.0
    %339 = vmatprep.subr.mxu0 0.0
    %340 = vmatpush1.msra.mxu0 0.0
    %341 = vmatprep.subr.mxu0 0.0
    %342 = vmatpush1.msra.mxu0 0.0
    %343 = vmatprep.subr.mxu0 0.0
    %344 = vmatpush1.msra.mxu0 0.0
    %345 = vmatprep.subr.mxu0 0.0
    %346 = vmatpush1.msra.mxu0 0.0
    %347 = vmatprep.subr.mxu0 0.0
    %348 = vmatpush1.msra.mxu0 0.0
    %349 = vmatprep.subr.mxu0 0.0
    %350 = vmatpush1.msra.mxu0 0.0
    %351 = vmatprep.subr.mxu0 0.0
    %352 = vmatpush1.msra.mxu0 0.0
    %353 = vmatprep.subr.mxu0 0.0
    %354 = vmatpush1.msra.mxu0 0.0
    %355 = vmatprep.subr.mxu0 0.0
    %356 = vmatpush1.msra.mxu0 0.0
    %357 = vmatprep.subr.mxu0 0.0
    %358 = vmatpush1.msra.mxu0 0.0
    %359 = vmatprep.subr.mxu0 0.0
    %360 = vmatpush1.msra.mxu0 0.0
    %361 = vmatprep.subr.mxu0 0.0
    %362 = vmatpush1.msra.mxu0 0.0
    %363 = vmatprep.subr.mxu0 0.0
    %364 = vmatpush1.msra.mxu0 0.0
    %365 = vmatprep.subr.mxu0 0.0
    %366 = vmatpush1.msra.mxu0 0.0
    %367 = vmatprep.subr.mxu0 0.0
    %368 = vmatpush1.msra.mxu0 0.0
    %369 = vmatprep.subr.mxu0 0.0
    %370 = vmatpush1.msra.mxu0 0.0
    %371 = vmatprep.subr.mxu0 0.0
    %372 = vmatpush1.msra.mxu0 0.0
    %373 = vmatprep.subr.mxu0 0.0
    %374 = vmatpush1.msra.mxu0 0.0
    %375 = vmatprep.subr.mxu0 0.0
    %376 = vmatpush1.msra.mxu0 0.0
    %377 = vmatprep.subr.mxu0 0.0
    %378 = vmatpush1.msra.mxu0 0.0
    %379 = vmatprep.subr.mxu0 0.0
    %380 = vmatpush1.msra.mxu0 0.0
    %381 = vmatprep.subr.mxu0 0.0
    %382 = vmatpush1.msra.mxu0 0.0
    %383 = vmatprep.subr.mxu0 0.0
    %384 = vmatpush1.msra.mxu0 0.0
    %385 = vmatprep.subr.mxu0 0.0
    %386 = vmatpush1.msra.mxu0 0.0
    %387 = vmatprep.subr.mxu0 0.0
    %388 = vmatpush1.msra.mxu0 0.0
    %389 = vmatprep.mubr.f32.mxu0 0.0
    %390 = vmatmul.mubr.f32.gmra.mrb[0].mxu0 %v323
    %v391 = vpop.f32.mrb[0].mxu0
    %v392 = vadd.f32 %v321, %v391
    %v393 = vpop.f32.mrb[0].mxu0
    %394 = vdwg.mxu0
    %395 = vset.pattern.permute.xlu0 33
    %396 = vperm.xlu0 %395, %v317
    %v397 = vpop.permute.xlu0 %396
    %v399 = vmax.f32 %v392, %v397
    %400 = vset.pattern.permute.xlu0 34
    %401 = vperm.xlu0 %400, %v317
    %v402 = vpop.permute.xlu0 %401
    %v404 = vmin.f32 %v399, %v402
    %405 = vst [vmem:[#allocation7] sm:$0xff] %v404
    // Predicated region
    $region18: #{tpu_custom_call.1} parent=1 // pred_check
      _
    $region19: #{tpu_custom_call.1} parent=1 // pred_check_branch
      %407 = sbr.rel (0) target = $region21
    $region20: #{tpu_custom_call.1} parent=1 // pred_region
      %s409 = ssub.s32 128, 128
      %410 = vsyncadd [#allocation4], %s409
      %s412 = sshll.u32 [#allocation7], 4
      %s413 = int_to_ptr.vmem [resolvable:$true] %s412
      %415 = dma.vmem_to_hbm [thread:$0]  %s413, 128, %s2, [#allocation4]
    $region21: #{tpu_custom_call.1} parent=1 // pred_fallthru
      _
    // Predicated region
    $region22: #{tpu_custom_call.1} parent=1 // pred_check
      _
    $region23: #{tpu_custom_call.1} parent=1 // pred_check_branch
      %417 = sbr.rel (0) target = $region25
    $region24: #{tpu_custom_call.1} parent=1 // pred_region
      %418 = dma.done [#allocation4], 128
    $region25: #{tpu_custom_call.1} parent=1 // pred_fallthru
      _
    %419 = vsyncpa [#allocation3], 1
    %420 = vsyncpa [#allocation6], 1
    %421 = vsyncpa [#allocation4], 1

</llo_original>
